<compile_context>
chip_gen: v6e
topology: v6e:2x2x1
jax: 0.10.0
libtpu: 0.0.40
codegen_flags: <defaults>
</compile_context>

<pallas_src>
import jax
import jax.numpy as jnp
from jax.experimental import pallas as pl
from jax.experimental.pallas import tpu as pltpu


# Logical layer widths of WideReimbursementNet: input_dim -> 128 -> 512 -> 128 -> 64 -> 32 -> 1
_HIDDEN = [128, 512, 128, 64, 32, 1]
# Lane-dense (padded-to-128) output widths used inside the kernel.
_PAD_OUT = [128, 512, 128, 128, 128, 128]
_BN_EPS = 1e-5


# ----------------------------- Pallas kernel ------------------------------ #
def _mlp_kernel(x_ref, w1, w2, w3, w4, w5, w6, b_ref, o_ref):
    """Whole 6-layer MLP for one (TN, D_in) batch tile.

    w*: bf16, BN-folded, lane-dense padded.  b_ref: (8, 512) f32 packed bias slab.
    """
    ws = (w1, w2, w3, w4, w5, w6)

    h = x_ref[...].astype(jnp.bfloat16)
    for li in range(6):
        dout = _PAD_OUT[li]
        # MXU matmul, f32 accumulation.
        acc = jnp.dot(h, ws[li][...], preferred_element_type=jnp.float32)
        # Bias (BN already folded in); static slice of the packed slab.
        acc = acc + b_ref[li:li + 1, 0:dout]
        if li < 5:
            # ReLU in f32 (VPU-native on v5e too); Dropout is identity in eval mode.
            h = jnp.maximum(acc, 0.0).astype(jnp.bfloat16)
        else:
            # Final Linear(32, 1): lane-dense (TN, 128) output, real value in column 0.
            o_ref[...] = acc


# ------------------------------ JAX wrapper -------------------------------- #
def wide_reimbursement_net(x, weights, bias_slab, *, block_n=256):
    """x: (N, input_dim) f32. weights: 6 bf16 matrices. bias_slab: (8, 512) f32."""
    n, d_in = x.shape

    # Batch tile: multiple of 8 sublanes, capped at block_n.
    if n >= block_n:
        tn = block_n
    else:
        tn = ((n + 7) // 8) * 8
    n_pad = ((n + tn - 1) // tn) * tn
    if n_pad != n:
        x = jnp.pad(x, ((0, n_pad - n), (0, 0)))
    grid = (n_pad // tn,)

    in_specs = [pl.BlockSpec((tn, d_in), lambda i: (i, 0))]          # batch-tiled input
    in_specs += [pl.BlockSpec(w.shape, lambda i: (0, 0)) for w in weights]  # resident weights
    in_specs += [pl.BlockSpec(bias_slab.shape, lambda i: (0, 0))]    # resident bias slab

    flops = int(2 * n_pad * sum(w.shape[0] * w.shape[1] for w in weights))
    bytes_accessed = int(
        sum(w.size * w.dtype.itemsize for w in weights)
        + bias_slab.size * 4
        + n_pad * (d_in + 128) * 4)

    out = pl.pallas_call(
        _mlp_kernel,
        grid=grid,
        in_specs=in_specs,
        out_specs=pl.BlockSpec((tn, 128), lambda i: (i, 0)),
        out_shape=jax.ShapeDtypeStruct((n_pad, 128), jnp.float32),
        compiler_params=pltpu.CompilerParams(
            dimension_semantics=("parallel",)),
        cost_estimate=pl.CostEstimate(
            flops=flops, transcendentals=0, bytes_accessed=bytes_accessed),
    )(x, *weights, bias_slab)

    return out[:n, :1]


# ------------------------- deterministic parameters ------------------------ #
def _init_params(input_dim, key):
    """PyTorch-default Linear init + fresh BatchNorm1d, then BN-fold + lane-pad + bf16."""
    dims = [input_dim] + _HIDDEN
    weights = []      # padded, BN-folded, bf16 — fed to the kernel
    bias_rows = []    # packed into one (8, 512) f32 slab
    raw = []          # f32 originals for the semantic reference

    for li in range(6):
        d_in, d_out = dims[li], dims[li + 1]
        key, kw, kb = jax.random.split(key, 3)
        bound = float(d_in) ** -0.5
        w = jax.random.uniform(kw, (d_in, d_out), jnp.float32, -bound, bound)
        b = jax.random.uniform(kb, (d_out,), jnp.float32, -bound, bound)

        if li < 5:  # Linear followed by BatchNorm1d (fresh running stats)
            gamma = jnp.ones((d_out,), jnp.float32)
            beta = jnp.zeros((d_out,), jnp.float32)
            running_mean = jnp.zeros((d_out,), jnp.float32)
            running_var = jnp.ones((d_out,), jnp.float32)
            scale = gamma / jnp.sqrt(running_var + _BN_EPS)
            shift = beta - running_mean * scale
        else:
            scale = jnp.ones((d_out,), jnp.float32)
            shift = jnp.zeros((d_out,), jnp.float32)
        raw.append((w, b, scale, shift, li < 5))

        # Fold BN into the Linear.
        w_f = w * scale[None, :]
        b_f = b * scale + shift

        # Lane-dense padding (zeros in padded rows/cols keep the math exact).
        din_pad = input_dim if li == 0 else _PAD_OUT[li - 1]
        dout_pad = _PAD_OUT[li]
        wp = jnp.zeros((din_pad, dout_pad), jnp.float32).at[:d_in, :d_out].set(w_f)
        bp = jnp.zeros((512,), jnp.float32).at[:d_out].set(b_f)

        weights.append(wp.astype(jnp.bfloat16))
        bias_rows.append(bp)

    bias_slab = jnp.stack(bias_rows + [jnp.zeros((512,), jnp.float32)] * 2)  # (8, 512)
    return weights, bias_slab, raw


# --------------------------- pure-JAX references ---------------------------- #
def _reference_bf16(x, weights, bias_slab):
    """Mirrors the kernel's math (bf16 inputs, f32 accumulation) in plain JAX."""
    h = x.astype(jnp.bfloat16)
    out = None
    for li in range(6):
        dout = _PAD_OUT[li]
        acc = jnp.dot(h, weights[li], preferred_element_type=jnp.float32)
        acc = acc + bias_slab[li:li + 1, :dout]
        if li < 5:
            h = jnp.maximum(acc, 0.0).astype(jnp.bfloat16)
        else:
            out = acc
    return out[:, :1]


def _reference_f32(x, raw):
    """Original module semantics in f32 (Linear -> BN(eval) -> ReLU; Dropout = id)."""
    h = x
    for w, b, scale, shift, has_bn in raw:
        h = h @ w + b[None, :]
        if has_bn:
            h = h * scale[None, :] + shift[None, :]
            h = jnp.maximum(h, 0.0)
    return h


if __name__ == "__main__":
    batch, input_dim = 8, 32
    key = jax.random.PRNGKey(0)
    key, kx = jax.random.split(key)
    x = jax.random.normal(kx, (batch, input_dim), jnp.float32)

    weights, bias_slab, raw = _init_params(input_dim, key)

    out = wide_reimbursement_net(x, weights, bias_slab)
    out = jax.block_until_ready(out)
    assert out.shape == (batch, 1)

    # Tight check against a JAX reference using the same bf16 weights / folded biases.
    ref_bf16 = _reference_bf16(x, weights, bias_slab)
    assert jnp.allclose(out, ref_bf16, atol=1e-2, rtol=1e-2), "mismatch vs bf16 reference"

    # Loose semantic check against the original f32 Linear+BN(eval)+ReLU model.
    ref_f32 = _reference_f32(x, raw)
    assert jnp.allclose(out, ref_f32, atol=1e-1, rtol=1e-1), "mismatch vs f32 semantics"

    print("KERNEL_OK")
</pallas_src>

<mosaic_0001>
module attributes {stable_mosaic.version = 11 : i64} {
  func.func @_mlp_kernel(%arg0: i32, %arg1: memref<8x32xf32, #tpu.memory_space<vmem>>, %arg2: memref<32x128xbf16, #tpu.memory_space<vmem>>, %arg3: memref<128x512xbf16, #tpu.memory_space<vmem>>, %arg4: memref<512x128xbf16, #tpu.memory_space<vmem>>, %arg5: memref<128x128xbf16, #tpu.memory_space<vmem>>, %arg6: memref<128x128xbf16, #tpu.memory_space<vmem>>, %arg7: memref<128x128xbf16, #tpu.memory_space<vmem>>, %arg8: memref<8x512xf32, #tpu.memory_space<vmem>>, %arg9: memref<8x128xf32, #tpu.memory_space<vmem>>) attributes {dimension_semantics = [#tpu.dimension_semantics<parallel>], iteration_bounds = array<i64: 1>, scalar_prefetch = 0 : i64, scratch_operands = 0 : i64, tpu.core_type = #tpu.core_type<tc>, window_params = [{transform_indices = @transform_0, window_bounds = array<i64: 8, 32>}, {pipeline_mode = #tpu.pipeline_mode<synchronous>, transform_indices = @transform_1, window_bounds = array<i64: 32, 128>}, {pipeline_mode = #tpu.pipeline_mode<synchronous>, transform_indices = @transform_2, window_bounds = array<i64: 128, 512>}, {pipeline_mode = #tpu.pipeline_mode<synchronous>, transform_indices = @transform_3, window_bounds = array<i64: 512, 128>}, {pipeline_mode = #tpu.pipeline_mode<synchronous>, transform_indices = @transform_4, window_bounds = array<i64: 128, 128>}, {pipeline_mode = #tpu.pipeline_mode<synchronous>, transform_indices = @transform_5, window_bounds = array<i64: 128, 128>}, {pipeline_mode = #tpu.pipeline_mode<synchronous>, transform_indices = @transform_6, window_bounds = array<i64: 128, 128>}, {pipeline_mode = #tpu.pipeline_mode<synchronous>, transform_indices = @transform_7, window_bounds = array<i64: 8, 512>}, {transform_indices = @transform_8, window_bounds = array<i64: 8, 128>}]} {
    %c0 = arith.constant 0 : index
    %c0_0 = arith.constant 0 : index
    %0 = vector.load %arg1[%c0, %c0_0] : memref<8x32xf32, #tpu.memory_space<vmem>>, vector<8x32xf32>
    %1 = arith.truncf %0 : vector<8x32xf32> to vector<8x32xbf16>
    %c0_1 = arith.constant 0 : index
    %c0_2 = arith.constant 0 : index
    %2 = vector.load %arg2[%c0_1, %c0_2] : memref<32x128xbf16, #tpu.memory_space<vmem>>, vector<32x128xbf16>
    %cst = arith.constant dense<0.000000e+00> : vector<8x128xf32>
    %3 = tpu.matmul %1, %2, %cst {dimension_numbers = #tpu.dot_dimension_numbers<[1], [0], [0], [1], [0, 0, 1, 1], [], []>} : vector<8x32xbf16>, vector<32x128xbf16>, vector<8x128xf32> -> vector<8x128xf32>
    %c0_3 = arith.constant 0 : index
    %c0_4 = arith.constant 0 : index
    %4 = vector.load %arg8[%c0_3, %c0_4] : memref<8x512xf32, #tpu.memory_space<vmem>>, vector<1x128xf32>
    %5 = vector.broadcast %4 : vector<1x128xf32> to vector<8x128xf32>
    %6 = arith.addf %3, %5 : vector<8x128xf32>
    %cst_5 = arith.constant 0.000000e+00 : f32
    %7 = vector.broadcast %cst_5 : f32 to vector<8x128xf32>
    %8 = arith.maximumf %6, %7 : vector<8x128xf32>
    %9 = arith.truncf %8 : vector<8x128xf32> to vector<8x128xbf16>
    %c0_6 = arith.constant 0 : index
    %c0_7 = arith.constant 0 : index
    %10 = vector.load %arg3[%c0_6, %c0_7] : memref<128x512xbf16, #tpu.memory_space<vmem>>, vector<128x512xbf16>
    %cst_8 = arith.constant dense<0.000000e+00> : vector<8x512xf32>
    %11 = tpu.matmul %9, %10, %cst_8 {dimension_numbers = #tpu.dot_dimension_numbers<[1], [0], [0], [1], [0, 0, 1, 1], [], []>} : vector<8x128xbf16>, vector<128x512xbf16>, vector<8x512xf32> -> vector<8x512xf32>
    %c1 = arith.constant 1 : index
    %c0_9 = arith.constant 0 : index
    %12 = vector.load %arg8[%c1, %c0_9] : memref<8x512xf32, #tpu.memory_space<vmem>>, vector<1x512xf32>
    %13 = vector.broadcast %12 : vector<1x512xf32> to vector<8x512xf32>
    %14 = arith.addf %11, %13 : vector<8x512xf32>
    %cst_10 = arith.constant 0.000000e+00 : f32
    %15 = vector.broadcast %cst_10 : f32 to vector<8x512xf32>
    %16 = arith.maximumf %14, %15 : vector<8x512xf32>
    %17 = arith.truncf %16 : vector<8x512xf32> to vector<8x512xbf16>
    %c0_11 = arith.constant 0 : index
    %c0_12 = arith.constant 0 : index
    %18 = vector.load %arg4[%c0_11, %c0_12] : memref<512x128xbf16, #tpu.memory_space<vmem>>, vector<512x128xbf16>
    %cst_13 = arith.constant dense<0.000000e+00> : vector<8x128xf32>
    %19 = tpu.matmul %17, %18, %cst_13 {dimension_numbers = #tpu.dot_dimension_numbers<[1], [0], [0], [1], [0, 0, 1, 1], [], []>} : vector<8x512xbf16>, vector<512x128xbf16>, vector<8x128xf32> -> vector<8x128xf32>
    %c2 = arith.constant 2 : index
    %c0_14 = arith.constant 0 : index
    %20 = vector.load %arg8[%c2, %c0_14] : memref<8x512xf32, #tpu.memory_space<vmem>>, vector<1x128xf32>
    %21 = vector.broadcast %20 : vector<1x128xf32> to vector<8x128xf32>
    %22 = arith.addf %19, %21 : vector<8x128xf32>
    %cst_15 = arith.constant 0.000000e+00 : f32
    %23 = vector.broadcast %cst_15 : f32 to vector<8x128xf32>
    %24 = arith.maximumf %22, %23 : vector<8x128xf32>
    %25 = arith.truncf %24 : vector<8x128xf32> to vector<8x128xbf16>
    %c0_16 = arith.constant 0 : index
    %c0_17 = arith.constant 0 : index
    %26 = vector.load %arg5[%c0_16, %c0_17] : memref<128x128xbf16, #tpu.memory_space<vmem>>, vector<128x128xbf16>
    %cst_18 = arith.constant dense<0.000000e+00> : vector<8x128xf32>
    %27 = tpu.matmul %25, %26, %cst_18 {dimension_numbers = #tpu.dot_dimension_numbers<[1], [0], [0], [1], [0, 0, 1, 1], [], []>} : vector<8x128xbf16>, vector<128x128xbf16>, vector<8x128xf32> -> vector<8x128xf32>
    %c3 = arith.constant 3 : index
    %c0_19 = arith.constant 0 : index
    %28 = vector.load %arg8[%c3, %c0_19] : memref<8x512xf32, #tpu.memory_space<vmem>>, vector<1x128xf32>
    %29 = vector.broadcast %28 : vector<1x128xf32> to vector<8x128xf32>
    %30 = arith.addf %27, %29 : vector<8x128xf32>
    %cst_20 = arith.constant 0.000000e+00 : f32
    %31 = vector.broadcast %cst_20 : f32 to vector<8x128xf32>
    %32 = arith.maximumf %30, %31 : vector<8x128xf32>
    %33 = arith.truncf %32 : vector<8x128xf32> to vector<8x128xbf16>
    %c0_21 = arith.constant 0 : index
    %c0_22 = arith.constant 0 : index
    %34 = vector.load %arg6[%c0_21, %c0_22] : memref<128x128xbf16, #tpu.memory_space<vmem>>, vector<128x128xbf16>
    %cst_23 = arith.constant dense<0.000000e+00> : vector<8x128xf32>
    %35 = tpu.matmul %33, %34, %cst_23 {dimension_numbers = #tpu.dot_dimension_numbers<[1], [0], [0], [1], [0, 0, 1, 1], [], []>} : vector<8x128xbf16>, vector<128x128xbf16>, vector<8x128xf32> -> vector<8x128xf32>
    %c4 = arith.constant 4 : index
    %c0_24 = arith.constant 0 : index
    %36 = vector.load %arg8[%c4, %c0_24] : memref<8x512xf32, #tpu.memory_space<vmem>>, vector<1x128xf32>
    %37 = vector.broadcast %36 : vector<1x128xf32> to vector<8x128xf32>
    %38 = arith.addf %35, %37 : vector<8x128xf32>
    %cst_25 = arith.constant 0.000000e+00 : f32
    %39 = vector.broadcast %cst_25 : f32 to vector<8x128xf32>
    %40 = arith.maximumf %38, %39 : vector<8x128xf32>
    %41 = arith.truncf %40 : vector<8x128xf32> to vector<8x128xbf16>
    %c0_26 = arith.constant 0 : index
    %c0_27 = arith.constant 0 : index
    %42 = vector.load %arg7[%c0_26, %c0_27] : memref<128x128xbf16, #tpu.memory_space<vmem>>, vector<128x128xbf16>
    %cst_28 = arith.constant dense<0.000000e+00> : vector<8x128xf32>
    %43 = tpu.matmul %41, %42, %cst_28 {dimension_numbers = #tpu.dot_dimension_numbers<[1], [0], [0], [1], [0, 0, 1, 1], [], []>} : vector<8x128xbf16>, vector<128x128xbf16>, vector<8x128xf32> -> vector<8x128xf32>
    %c5 = arith.constant 5 : index
    %c0_29 = arith.constant 0 : index
    %44 = vector.load %arg8[%c5, %c0_29] : memref<8x512xf32, #tpu.memory_space<vmem>>, vector<1x128xf32>
    %45 = vector.broadcast %44 : vector<1x128xf32> to vector<8x128xf32>
    %46 = arith.addf %43, %45 : vector<8x128xf32>
    %c0_30 = arith.constant 0 : index
    %c0_31 = arith.constant 0 : index
    %47 = vector.load %arg9[%c0_30, %c0_31] : memref<8x128xf32, #tpu.memory_space<vmem>>, vector<8x128xf32>
    tpu.vector_store %arg9[%c0_30, %c0_31], %46 {strides = array<i32>} : memref<8x128xf32, #tpu.memory_space<vmem>>, vector<8x128xf32>,
    return
  }
  func.func @transform_0(%arg0: i32) -> (i32, i32) {
    %c0_i32 = arith.constant 0 : i32
    %c0_i32_0 = arith.constant 0 : i32
    return %arg0, %c0_i32 : i32, i32
  }
  func.func @transform_1(%arg0: i32) -> (i32, i32) {
    %c0_i32 = arith.constant 0 : i32
    %c0_i32_0 = arith.constant 0 : i32
    %c0_i32_1 = arith.constant 0 : i32
    return %c0_i32, %c0_i32_0 : i32, i32
  }
  func.func @transform_2(%arg0: i32) -> (i32, i32) {
    %c0_i32 = arith.constant 0 : i32
    %c0_i32_0 = arith.constant 0 : i32
    %c0_i32_1 = arith.constant 0 : i32
    return %c0_i32, %c0_i32_0 : i32, i32
  }
  func.func @transform_3(%arg0: i32) -> (i32, i32) {
    %c0_i32 = arith.constant 0 : i32
    %c0_i32_0 = arith.constant 0 : i32
    %c0_i32_1 = arith.constant 0 : i32
    return %c0_i32, %c0_i32_0 : i32, i32
  }
  func.func @transform_4(%arg0: i32) -> (i32, i32) {
    %c0_i32 = arith.constant 0 : i32
    %c0_i32_0 = arith.constant 0 : i32
    %c0_i32_1 = arith.constant 0 : i32
    return %c0_i32, %c0_i32_0 : i32, i32
  }
  func.func @transform_5(%arg0: i32) -> (i32, i32) {
    %c0_i32 = arith.constant 0 : i32
    %c0_i32_0 = arith.constant 0 : i32
    %c0_i32_1 = arith.constant 0 : i32
    return %c0_i32, %c0_i32_0 : i32, i32
  }
  func.func @transform_6(%arg0: i32) -> (i32, i32) {
    %c0_i32 = arith.constant 0 : i32
    %c0_i32_0 = arith.constant 0 : i32
    %c0_i32_1 = arith.constant 0 : i32
    return %c0_i32, %c0_i32_0 : i32, i32
  }
  func.func @transform_7(%arg0: i32) -> (i32, i32) {
    %c0_i32 = arith.constant 0 : i32
    %c0_i32_0 = arith.constant 0 : i32
    %c0_i32_1 = arith.constant 0 : i32
    return %c0_i32, %c0_i32_0 : i32, i32
  }
  func.func @transform_8(%arg0: i32) -> (i32, i32) {
    %c0_i32 = arith.constant 0 : i32
    %c0_i32_0 = arith.constant 0 : i32
    return %arg0, %c0_i32 : i32, i32
  }
}

</mosaic_0001>

<llo_original>
// kernel: tpu_custom_call.1
$region0: #{tpu_custom_call.1}
  #allocation0 [shape = 'u32[]', space=smem, size = 0x4, offset = 0x4, fixed_abs, tag = 'smem constant byte address 0x4 - core index']
  #allocation1 [shape = 'u32[144,128]{1,0:T(1,128)}', space=vmem, size = 0x12000, scoped, tag = 'internal scratch']
  %s0 = inlined_call_operand.hbm [shape: f32[8,32], index: 0, kind: input, shape index: {}]
  %s1 = inlined_call_operand.hbm [shape: bf16[32,128], index: 1, kind: input, shape index: {}]
  %s2 = inlined_call_operand.hbm [shape: bf16[128,512], index: 2, kind: input, shape index: {}]
  %s3 = inlined_call_operand.hbm [shape: bf16[512,128], index: 3, kind: input, shape index: {}]
  %s4 = inlined_call_operand.hbm [shape: bf16[128,128], index: 4, kind: input, shape index: {}]
  %s5 = inlined_call_operand.hbm [shape: bf16[128,128], index: 5, kind: input, shape index: {}]
  %s6 = inlined_call_operand.hbm [shape: bf16[128,128], index: 6, kind: input, shape index: {}]
  %s7 = inlined_call_operand.hbm [shape: f32[8,512], index: 7, kind: input, shape index: {}]
  %s8 = inlined_call_operand.hbm [shape: f32[8,128], index: 8, kind: output, shape index: {}]
  %s9 = sld [smem:[#allocation0]]
  $region74: #{tpu_custom_call.1} parent=0
    _
  %s11 = ssub.s32 1, %s9
  %s12 = scalar_select 0, %s11, %s9
  $region1: #{tpu_custom_call.1} parent=0
    #allocation2 [shape = 'u8[4096]{0}', space=vmem, size = 0x1000, scoped, tag = 'input window, operand 0, single buffered']
    #allocation3 [shape = 's32[1]{0}', space=sflag, size = 0x4, scoped, tag = 'scoped memory for tpu_custom_call.1']
    #allocation4 [shape = 's32[1]{0}', space=sflag, size = 0x4, scoped, tag = 'scoped memory for tpu_custom_call.1']
    #allocation5 [shape = 'u8[8192]{0}', space=vmem, size = 0x2000, scoped, tag = 'input window, operand 1, single buffered']
    #allocation6 [shape = 's32[1]{0}', space=sflag, size = 0x4, scoped, tag = 'scoped memory for tpu_custom_call.1']
    #allocation7 [shape = 'u8[131072]{0}', space=vmem, size = 0x20000, scoped, tag = 'input window, operand 2, single buffered']
    #allocation8 [shape = 'u8[131072]{0}', space=vmem, size = 0x20000, scoped, tag = 'input window, operand 3, single buffered']
    #allocation9 [shape = 's32[1]{0}', space=sflag, size = 0x4, scoped, tag = 'scoped memory for tpu_custom_call.1']
    #allocation10 [shape = 'u8[32768]{0}', space=vmem, size = 0x8000, scoped, tag = 'input window, operand 4, single buffered']
    #allocation11 [shape = 'u8[32768]{0}', space=vmem, size = 0x8000, scoped, tag = 'input window, operand 5, single buffered']
    #allocation12 [shape = 's32[1]{0}', space=sflag, size = 0x4, scoped, tag = 'scoped memory for tpu_custom_call.1']
    #allocation13 [shape = 'u8[32768]{0}', space=vmem, size = 0x8000, scoped, tag = 'input window, operand 6, single buffered']
    #allocation14 [shape = 'u8[16384]{0}', space=vmem, size = 0x4000, scoped, tag = 'input window, operand 7, single buffered']
    #allocation15 [shape = 's32[1]{0}', space=sflag, size = 0x4, scoped, tag = 'scoped memory for tpu_custom_call.1']
    #allocation16 [shape = 'u8[4096]{0}', space=vmem, size = 0x1000, scoped, tag = 'output window, operand 0, single buffered']
    %13 = vsyncpa [#allocation3], 0
    %14 = vsyncpa [#allocation6], 0
    %15 = vsyncpa [#allocation9], 0
    %16 = vsyncpa [#allocation12], 0
    %17 = vsyncpa [#allocation15], 0
    %18 = vsyncpa [#allocation4], 0
    // Predicated region
    $region2: #{tpu_custom_call.1} parent=1 // pred_check
      _
    $region3: #{tpu_custom_call.1} parent=1 // pred_check_branch
      %20 = sbr.rel (0) target = $region5
    $region4: #{tpu_custom_call.1} parent=1 // pred_region
      %s22 = ssub.s32 128, 128
      %23 = vsyncadd [#allocation3], %s22
      %s25 = sshll.u32 [#allocation2], 4
      %s26 = int_to_ptr.vmem [resolvable:$true] %s25
      %28 = dma.hbm_to_vmem [thread:$0]  %s0, 128, %s26, [#allocation3]
    $region5: #{tpu_custom_call.1} parent=1 // pred_fallthru
      _
    // Predicated region
    $region6: #{tpu_custom_call.1} parent=1 // pred_check
      _
    $region7: #{tpu_custom_call.1} parent=1 // pred_check_branch
      %30 = sbr.rel (0) target = $region9
    $region8: #{tpu_custom_call.1} parent=1 // pred_region
      %s32 = ssub.s32 256, 256
      %33 = vsyncadd [#allocation6], %s32
      %s34 = sshll.u32 [#allocation5], 4
      %s35 = int_to_ptr.vmem [resolvable:$true] %s34
      %40 = dma.hbm_to_vmem [thread:$0]  %s1, 256, %s35, [#allocation6], 64, 64, 4
    $region9: #{tpu_custom_call.1} parent=1 // pred_fallthru
      _
    // Predicated region
    $region10: #{tpu_custom_call.1} parent=1 // pred_check
      _
    $region11: #{tpu_custom_call.1} parent=1 // pred_check_branch
      %42 = sbr.rel (0) target = $region13
    $region12: #{tpu_custom_call.1} parent=1 // pred_region
      %s44 = ssub.s32 4096, 4096
      %45 = vsyncadd [#allocation6], %s44
      %s46 = sshll.u32 [#allocation7], 4
      %s47 = int_to_ptr.vmem [resolvable:$true] %s46
      %52 = dma.hbm_to_vmem [thread:$0]  %s2, 4096, %s47, [#allocation6], 256, 256, 16
    $region13: #{tpu_custom_call.1} parent=1 // pred_fallthru
      _
    // Predicated region
    $region14: #{tpu_custom_call.1} parent=1 // pred_check
      _
    $region15: #{tpu_custom_call.1} parent=1 // pred_check_branch
      %54 = sbr.rel (0) target = $region17
    $region16: #{tpu_custom_call.1} parent=1 // pred_region
      %s56 = ssub.s32 4096, 4096
      %57 = vsyncadd [#allocation9], %s56
      %s58 = sshll.u32 [#allocation8], 4
      %s59 = int_to_ptr.vmem [resolvable:$true] %s58
      %64 = dma.hbm_to_vmem [thread:$0]  %s3, 4096, %s59, [#allocation9], 64, 64, 4
    $region17: #{tpu_custom_call.1} parent=1 // pred_fallthru
      _
    // Predicated region
    $region18: #{tpu_custom_call.1} parent=1 // pred_check
      _
    $region19: #{tpu_custom_call.1} parent=1 // pred_check_branch
      %66 = sbr.rel (0) target = $region21
    $region20: #{tpu_custom_call.1} parent=1 // pred_region
      %s68 = ssub.s32 1024, 1024
      %69 = vsyncadd [#allocation9], %s68
      %s70 = sshll.u32 [#allocation10], 4
      %s71 = int_to_ptr.vmem [resolvable:$true] %s70
      %76 = dma.hbm_to_vmem [thread:$0]  %s4, 1024, %s71, [#allocation9], 64, 64, 4
    $region21: #{tpu_custom_call.1} parent=1 // pred_fallthru
      _
    // Predicated region
    $region22: #{tpu_custom_call.1} parent=1 // pred_check
      _
    $region23: #{tpu_custom_call.1} parent=1 // pred_check_branch
      %78 = sbr.rel (0) target = $region25
    $region24: #{tpu_custom_call.1} parent=1 // pred_region
      %s80 = ssub.s32 1024, 1024
      %81 = vsyncadd [#allocation12], %s80
      %s82 = sshll.u32 [#allocation11], 4
      %s83 = int_to_ptr.vmem [resolvable:$true] %s82
      %88 = dma.hbm_to_vmem [thread:$0]  %s5, 1024, %s83, [#allocation12], 64, 64, 4
    $region25: #{tpu_custom_call.1} parent=1 // pred_fallthru
      _
    // Predicated region
    $region26: #{tpu_custom_call.1} parent=1 // pred_check
      _
    $region27: #{tpu_custom_call.1} parent=1 // pred_check_branch
      %90 = sbr.rel (0) target = $region29
    $region28: #{tpu_custom_call.1} parent=1 // pred_region
      %s92 = ssub.s32 1024, 1024
      %93 = vsyncadd [#allocation12], %s92
      %s94 = sshll.u32 [#allocation13], 4
      %s95 = int_to_ptr.vmem [resolvable:$true] %s94
      %100 = dma.hbm_to_vmem [thread:$0]  %s6, 1024, %s95, [#allocation12], 64, 64, 4
    $region29: #{tpu_custom_call.1} parent=1 // pred_fallthru
      _
    // Predicated region
    $region30: #{tpu_custom_call.1} parent=1 // pred_check
      _
    $region31: #{tpu_custom_call.1} parent=1 // pred_check_branch
      %102 = sbr.rel (0) target = $region33
    $region32: #{tpu_custom_call.1} parent=1 // pred_region
      %s104 = ssub.s32 512, 512
      %105 = vsyncadd [#allocation15], %s104
      %s107 = sshll.u32 [#allocation14], 4
      %s108 = int_to_ptr.vmem [resolvable:$true] %s107
      %110 = dma.hbm_to_vmem [thread:$0]  %s7, 512, %s108, [#allocation15]
    $region33: #{tpu_custom_call.1} parent=1 // pred_fallthru
      _
    // Predicated region
    $region34: #{tpu_custom_call.1} parent=1 // pred_check
      _
    $region35: #{tpu_custom_call.1} parent=1 // pred_check_branch
      %112 = sbr.rel (0) target = $region37
    $region36: #{tpu_custom_call.1} parent=1 // pred_region
      %113 = dma.done [#allocation3], 128
    $region37: #{tpu_custom_call.1} parent=1 // pred_fallthru
      _
    // Predicated region
    $region38: #{tpu_custom_call.1} parent=1 // pred_check
      _
    $region39: #{tpu_custom_call.1} parent=1 // pred_check_branch
      %115 = sbr.rel (0) target = $region41
    $region40: #{tpu_custom_call.1} parent=1 // pred_region
      %116 = dma.done [#allocation6], 256
    $region41: #{tpu_custom_call.1} parent=1 // pred_fallthru
      _
    // Predicated region
    $region42: #{tpu_custom_call.1} parent=1 // pred_check
      _
    $region43: #{tpu_custom_call.1} parent=1 // pred_check_branch
      %118 = sbr.rel (0) target = $region45
    $region44: #{tpu_custom_call.1} parent=1 // pred_region
      %119 = dma.done [#allocation6], 4096
    $region45: #{tpu_custom_call.1} parent=1 // pred_fallthru
      _
    // Predicated region
    $region46: #{tpu_custom_call.1} parent=1 // pred_check
      _
    $region47: #{tpu_custom_call.1} parent=1 // pred_check_branch
      %121 = sbr.rel (0) target = $region49
    $region48: #{tpu_custom_call.1} parent=1 // pred_region
      %122 = dma.done [#allocation9], 4096
    $region49: #{tpu_custom_call.1} parent=1 // pred_fallthru
      _
    // Predicated region
    $region50: #{tpu_custom_call.1} parent=1 // pred_check
      _
    $region51: #{tpu_custom_call.1} parent=1 // pred_check_branch
      %124 = sbr.rel (0) target = $region53
    $region52: #{tpu_custom_call.1} parent=1 // pred_region
      %125 = dma.done [#allocation9], 1024
    $region53: #{tpu_custom_call.1} parent=1 // pred_fallthru
      _
    // Predicated region
    $region54: #{tpu_custom_call.1} parent=1 // pred_check
      _
    $region55: #{tpu_custom_call.1} parent=1 // pred_check_branch
      %127 = sbr.rel (0) target = $region57
    $region56: #{tpu_custom_call.1} parent=1 // pred_region
      %128 = dma.done [#allocation12], 1024
    $region57: #{tpu_custom_call.1} parent=1 // pred_fallthru
      _
    // Predicated region
    $region58: #{tpu_custom_call.1} parent=1 // pred_check
      _
    $region59: #{tpu_custom_call.1} parent=1 // pred_check_branch
      %130 = sbr.rel (0) target = $region61
    $region60: #{tpu_custom_call.1} parent=1 // pred_region
      %131 = dma.done [#allocation12], 1024
    $region61: #{tpu_custom_call.1} parent=1 // pred_fallthru
      _
    // Predicated region
    $region62: #{tpu_custom_call.1} parent=1 // pred_check
      _
    $region63: #{tpu_custom_call.1} parent=1 // pred_check_branch
      %133 = sbr.rel (0) target = $region65
    $region64: #{tpu_custom_call.1} parent=1 // pred_region
      %134 = dma.done [#allocation15], 512
    $region65: #{tpu_custom_call.1} parent=1 // pred_fallthru
      _
    %v136 = vld [vmem:[#allocation2] sm:$0xff]
    %v137 = vpack.c.bf16 %v136, %v136
    %v138 = vld [vmem:[#allocation5] sm:$0xf]
    %v139 = vld [vmem:[#allocation5 + $0x4] sm:$0xf]
    %v140 = vld [vmem:[#allocation5 + $0x8] sm:$0xf]
    %v141 = vld [vmem:[#allocation5 + $0xc] sm:$0xf]
    %v142 = vld [vmem:[#allocation14] ss:$0 sm:$0xff]
    %v147 = vunpack.c.l.b16 %v138
    %v148 = vunpack.c.l.b16 %v139
    %v149 = vunpack.c.l.b16 %v140
    %v150 = vunpack.c.l.b16 %v141
    %v151 = vpack.c.b16 %v148, %v147
    %v152 = vpack.c.b16 %v150, %v149
    %vm155 = vcmask 261120
    %v157 = vsel %vm155, %v137, 0
    %159 = vmatprep.subr.bf16.mxu0 0
    %160 = vmatpush1.bf16.msra.mxu0 0
    %161 = vmatprep.subr.bf16.mxu0 0
    %162 = vmatpush1.bf16.msra.mxu0 0
    %163 = vmatprep.subr.bf16.mxu0 0
    %164 = vmatpush1.bf16.msra.mxu0 0
    %165 = vmatprep.subr.bf16.mxu0 0
    %166 = vmatpush1.bf16.msra.mxu0 0
    %167 = vmatprep.subr.bf16.mxu0 0
    %168 = vmatpush1.bf16.msra.mxu0 0
    %169 = vmatprep.subr.bf16.mxu0 0
    %170 = vmatpush1.bf16.msra.mxu0 0
    %171 = vmatprep.subr.bf16.mxu0 0
    %172 = vmatpush1.bf16.msra.mxu0 %v152
    %173 = vmatprep.subr.bf16.mxu0 0
    %174 = vmatpush1.bf16.msra.mxu0 %v151
    %175 = vmatprep.subr.bf16.mxu0 0
    %176 = vmatpush2.bf16.msra.mxu0 0
    %177 = vmatprep.subr.bf16.mxu0 0
    %178 = vmatpush2.bf16.msra.mxu0 0
    %179 = vmatprep.subr.bf16.mxu0 0
    %180 = vmatpush2.bf16.msra.mxu0 0
    %181 = vmatprep.subr.bf16.mxu0 0
    %182 = vmatpush2.bf16.msra.mxu0 0
    %183 = vmatprep.subr.bf16.mxu0 0
    %184 = vmatpush2.bf16.msra.mxu0 0
    %185 = vmatprep.subr.bf16.mxu0 0
    %186 = vmatpush2.bf16.msra.mxu0 0
    %187 = vmatprep.subr.bf16.mxu0 0
    %188 = vmatpush2.bf16.msra.mxu0 0
    %189 = vmatprep.subr.bf16.mxu0 0
    %190 = vmatpush2.bf16.msra.mxu0 0
    %191 = vmatprep.mubr.bf16.mxu0 0
    %192 = vmatmul.mubr.bf16.gmra.mxu0 %v157
    %v193 = vpop.f32.mrf.mxu0
    %v194 = vadd.f32 %v142, %v193
    %v195 = vpop.f32.mrf.mxu0
    %v196 = vpop.f32.mrf.mxu0
    %v197 = vpop.f32.mrf.mxu0
    %198 = vdwg.mxu0
    %v199 = vmax.f32 %v194, 0.0
    %v200 = vpack.c.bf16 %v199, %v199
    %v201 = vld [vmem:[#allocation7] sm:$0xff]
    %v202 = vld [vmem:[#allocation7 + $0x8] sm:$0xff]
    %v203 = vld [vmem:[#allocation7 + $0x10] sm:$0xff]
    %v204 = vld [vmem:[#allocation7 + $0x18] sm:$0xff]
    %v205 = vld [vmem:[#allocation7 + $0x20] sm:$0xff]
    %v206 = vld [vmem:[#allocation7 + $0x28] sm:$0xff]
    %v207 = vld [vmem:[#allocation7 + $0x30] sm:$0xff]
    %v208 = vld [vmem:[#allocation7 + $0x38] sm:$0xff]
    %v209 = vld [vmem:[#allocation7 + $0x40] sm:$0xff]
    %v210 = vld [vmem:[#allocation7 + $0x48] sm:$0xff]
    %v211 = vld [vmem:[#allocation7 + $0x50] sm:$0xff]
    %v212 = vld [vmem:[#allocation7 + $0x58] sm:$0xff]
    %v213 = vld [vmem:[#allocation7 + $0x60] sm:$0xff]
    %v214 = vld [vmem:[#allocation7 + $0x68] sm:$0xff]
    %v215 = vld [vmem:[#allocation7 + $0x70] sm:$0xff]
    %v216 = vld [vmem:[#allocation7 + $0x78] sm:$0xff]
    %v217 = vld [vmem:[#allocation7 + $0x80] sm:$0xff]
    %v218 = vld [vmem:[#allocation7 + $0x88] sm:$0xff]
    %v219 = vld [vmem:[#allocation7 + $0x90] sm:$0xff]
    %v220 = vld [vmem:[#allocation7 + $0x98] sm:$0xff]
    %v221 = vld [vmem:[#allocation7 + $0xa0] sm:$0xff]
    %v222 = vld [vmem:[#allocation7 + $0xa8] sm:$0xff]
    %v223 = vld [vmem:[#allocation7 + $0xb0] sm:$0xff]
    %v224 = vld [vmem:[#allocation7 + $0xb8] sm:$0xff]
    %v225 = vld [vmem:[#allocation7 + $0xc0] sm:$0xff]
    %v226 = vld [vmem:[#allocation7 + $0xc8] sm:$0xff]
    %v227 = vld [vmem:[#allocation7 + $0xd0] sm:$0xff]
    %v228 = vld [vmem:[#allocation7 + $0xd8] sm:$0xff]
    %v229 = vld [vmem:[#allocation7 + $0xe0] sm:$0xff]
    %v230 = vld [vmem:[#allocation7 + $0xe8] sm:$0xff]
    %v231 = vld [vmem:[#allocation7 + $0xf0] sm:$0xff]
    %v232 = vld [vmem:[#allocation7 + $0xf8] sm:$0xff]
    %s233 = scalar_lea.vmem [#allocation14], 1
    %v234 = vld [vmem:[%s233] ss:$8 sm:$0xf]
    %v236 = vlaneseq
    %v237 = vshrl.u32 %v236, 7
    %v238 = vsub.s32 0, %v237
    %v239 = vrot.slane %v234, %v238
    %v240 = vlaneseq
    %v241 = vshrl.u32 %v240, 7
    %v242 = vsub.s32 1, %v241
    %v243 = vrot.slane %v234, %v242
    %v244 = vlaneseq
    %v245 = vshrl.u32 %v244, 7
    %v246 = vsub.s32 2, %v245
    %v247 = vrot.slane %v234, %v246
    %v248 = vlaneseq
    %v249 = vshrl.u32 %v248, 7
    %v250 = vsub.s32 3, %v249
    %v251 = vrot.slane %v234, %v250
    %v288 = vunpack.c.l.b16 %v201
    %v289 = vunpack.c.h.b16 %v201
    %v290 = vunpack.c.l.b16 %v202
    %v291 = vunpack.c.h.b16 %v202
    %v292 = vunpack.c.l.b16 %v203
    %v293 = vunpack.c.h.b16 %v203
    %v294 = vunpack.c.l.b16 %v204
    %v295 = vunpack.c.h.b16 %v204
    %v296 = vunpack.c.l.b16 %v205
    %v297 = vunpack.c.h.b16 %v205
    %v298 = vunpack.c.l.b16 %v206
    %v299 = vunpack.c.h.b16 %v206
    %v300 = vunpack.c.l.b16 %v207
    %v301 = vunpack.c.h.b16 %v207
    %v302 = vunpack.c.l.b16 %v208
    %v303 = vunpack.c.h.b16 %v208
    %v304 = vunpack.c.l.b16 %v209
    %v305 = vunpack.c.h.b16 %v209
    %v306 = vunpack.c.l.b16 %v210
    %v307 = vunpack.c.h.b16 %v210
    %v308 = vunpack.c.l.b16 %v211
    %v309 = vunpack.c.h.b16 %v211
    %v310 = vunpack.c.l.b16 %v212
    %v311 = vunpack.c.h.b16 %v212
    %v312 = vunpack.c.l.b16 %v213
    %v313 = vunpack.c.h.b16 %v213
    %v314 = vunpack.c.l.b16 %v214
    %v315 = vunpack.c.h.b16 %v214
    %v316 = vunpack.c.l.b16 %v215
    %v317 = vunpack.c.h.b16 %v215
    %v318 = vunpack.c.l.b16 %v216
    %v319 = vunpack.c.h.b16 %v216
    %v320 = vunpack.c.l.b16 %v217
    %v321 = vunpack.c.h.b16 %v217
    %v322 = vunpack.c.l.b16 %v218
    %v323 = vunpack.c.h.b16 %v218
    %v324 = vunpack.c.l.b16 %v219
    %v325 = vunpack.c.h.b16 %v219
    %v326 = vunpack.c.l.b16 %v220
    %v327 = vunpack.c.h.b16 %v220
    %v328 = vunpack.c.l.b16 %v221
    %v329 = vunpack.c.h.b16 %v221
    %v330 = vunpack.c.l.b16 %v222
    %v331 = vunpack.c.h.b16 %v222
    %v332 = vunpack.c.l.b16 %v223
    %v333 = vunpack.c.h.b16 %v223
    %v334 = vunpack.c.l.b16 %v224
    %v335 = vunpack.c.h.b16 %v224
    %v336 = vunpack.c.l.b16 %v225
    %v337 = vunpack.c.h.b16 %v225
    %v338 = vunpack.c.l.b16 %v226
    %v339 = vunpack.c.h.b16 %v226
    %v340 = vunpack.c.l.b16 %v227
    %v341 = vunpack.c.h.b16 %v227
    %v342 = vunpack.c.l.b16 %v228
    %v343 = vunpack.c.h.b16 %v228
    %v344 = vunpack.c.l.b16 %v229
    %v345 = vunpack.c.h.b16 %v229
    %v346 = vunpack.c.l.b16 %v230
    %v347 = vunpack.c.h.b16 %v230
    %v348 = vunpack.c.l.b16 %v231
    %v349 = vunpack.c.h.b16 %v231
    %v350 = vunpack.c.l.b16 %v232
    %v351 = vunpack.c.h.b16 %v232
    %v352 = vpack.c.b16 %v292, %v288
    %v353 = vpack.c.b16 %v293, %v289
    %v354 = vpack.c.b16 %v294, %v290
    %v355 = vpack.c.b16 %v295, %v291
    %v356 = vpack.c.b16 %v300, %v296
    %v357 = vpack.c.b16 %v301, %v297
    %v358 = vpack.c.b16 %v302, %v298
    %v359 = vpack.c.b16 %v303, %v299
    %v360 = vpack.c.b16 %v308, %v304
    %v361 = vpack.c.b16 %v309, %v305
    %v362 = vpack.c.b16 %v310, %v306
    %v363 = vpack.c.b16 %v311, %v307
    %v364 = vpack.c.b16 %v316, %v312
    %v365 = vpack.c.b16 %v317, %v313
    %v366 = vpack.c.b16 %v318, %v314
    %v367 = vpack.c.b16 %v319, %v315
    %v368 = vpack.c.b16 %v324, %v320
    %v369 = vpack.c.b16 %v325, %v321
    %v370 = vpack.c.b16 %v326, %v322
    %v371 = vpack.c.b16 %v327, %v323
    %v372 = vpack.c.b16 %v332, %v328
    %v373 = vpack.c.b16 %v333, %v329
    %v374 = vpack.c.b16 %v334, %v330
    %v375 = vpack.c.b16 %v335, %v331
    %v376 = vpack.c.b16 %v340, %v336
    %v377 = vpack.c.b16 %v341, %v337
    %v378 = vpack.c.b16 %v342, %v338
    %v379 = vpack.c.b16 %v343, %v339
    %v380 = vpack.c.b16 %v348, %v344
    %v381 = vpack.c.b16 %v349, %v345
    %v382 = vpack.c.b16 %v350, %v346
    %v383 = vpack.c.b16 %v351, %v347
    %416 = vmatprep.subr.bf16.mxu0 %v381
    %417 = vmatpush1.bf16.msra.mxu0 %v380
    %418 = vmatprep.subr.bf16.mxu0 %v377
    %419 = vmatpush1.bf16.msra.mxu0 %v376
    %420 = vmatprep.subr.bf16.mxu0 %v373
    %421 = vmatpush1.bf16.msra.mxu0 %v372
    %422 = vmatprep.subr.bf16.mxu0 %v369
    %423 = vmatpush1.bf16.msra.mxu0 %v368
    %424 = vmatprep.subr.bf16.mxu0 %v365
    %425 = vmatpush1.bf16.msra.mxu0 %v364
    %426 = vmatprep.subr.bf16.mxu0 %v361
    %427 = vmatpush1.bf16.msra.mxu0 %v360
    %428 = vmatprep.subr.bf16.mxu0 %v357
    %429 = vmatpush1.bf16.msra.mxu0 %v356
    %430 = vmatprep.subr.bf16.mxu0 %v353
    %431 = vmatpush1.bf16.msra.mxu0 %v352
    %432 = vmatprep.subr.bf16.mxu0 0
    %433 = vmatpush2.bf16.msra.mxu0 0
    %434 = vmatprep.subr.bf16.mxu0 0
    %435 = vmatpush2.bf16.msra.mxu0 0
    %436 = vmatprep.subr.bf16.mxu0 0
    %437 = vmatpush2.bf16.msra.mxu0 0
    %438 = vmatprep.subr.bf16.mxu0 0
    %439 = vmatpush2.bf16.msra.mxu0 0
    %440 = vmatprep.subr.bf16.mxu0 0
    %441 = vmatpush2.bf16.msra.mxu0 0
    %442 = vmatprep.subr.bf16.mxu0 0
    %443 = vmatpush2.bf16.msra.mxu0 0
    %444 = vmatprep.subr.bf16.mxu0 0
    %445 = vmatpush2.bf16.msra.mxu0 0
    %446 = vmatprep.subr.bf16.mxu0 0
    %447 = vmatpush2.bf16.msra.mxu0 0
    %448 = vmatprep.mubr.bf16.mxu0 0
    %449 = vmatmul.mubr.bf16.gmra.mxu0 %v200
    %v450 = vpop.f32.mrf.mxu0
    %v451 = vadd.f32 %v239, %v450
    %v452 = vpop.f32.mrf.mxu0
    %v453 = vadd.f32 %v243, %v452
    %v454 = vpop.f32.mrf.mxu0
    %v455 = vpop.f32.mrf.mxu0
    %456 = vdwg.mxu0
    %457 = vmatprep.subr.bf16.mxu0 %v383
    %458 = vmatpush1.bf16.msra.mxu0 %v382
    %459 = vmatprep.subr.bf16.mxu0 %v379
    %460 = vmatpush1.bf16.msra.mxu0 %v378
    %461 = vmatprep.subr.bf16.mxu0 %v375
    %462 = vmatpush1.bf16.msra.mxu0 %v374
    %463 = vmatprep.subr.bf16.mxu0 %v371
    %464 = vmatpush1.bf16.msra.mxu0 %v370
    %465 = vmatprep.subr.bf16.mxu0 %v367
    %466 = vmatpush1.bf16.msra.mxu0 %v366
    %467 = vmatprep.subr.bf16.mxu0 %v363
    %468 = vmatpush1.bf16.msra.mxu0 %v362
    %469 = vmatprep.subr.bf16.mxu0 %v359
    %470 = vmatpush1.bf16.msra.mxu0 %v358
    %471 = vmatprep.subr.bf16.mxu0 %v355
    %472 = vmatpush1.bf16.msra.mxu0 %v354
    %473 = vmatprep.subr.bf16.mxu0 0
    %474 = vmatpush2.bf16.msra.mxu0 0
    %475 = vmatprep.subr.bf16.mxu0 0
    %476 = vmatpush2.bf16.msra.mxu0 0
    %477 = vmatprep.subr.bf16.mxu0 0
    %478 = vmatpush2.bf16.msra.mxu0 0
    %479 = vmatprep.subr.bf16.mxu0 0
    %480 = vmatpush2.bf16.msra.mxu0 0
    %481 = vmatprep.subr.bf16.mxu0 0
    %482 = vmatpush2.bf16.msra.mxu0 0
    %483 = vmatprep.subr.bf16.mxu0 0
    %484 = vmatpush2.bf16.msra.mxu0 0
    %485 = vmatprep.subr.bf16.mxu0 0
    %486 = vmatpush2.bf16.msra.mxu0 0
    %487 = vmatprep.subr.bf16.mxu0 0
    %488 = vmatpush2.bf16.msra.mxu0 0
    %489 = vmatprep.mubr.bf16.mxu0 0
    %490 = vmatmul.mubr.bf16.gmra.mxu0 %v200
    %v491 = vpop.f32.mrf.mxu0
    %v492 = vadd.f32 %v247, %v491
    %v493 = vpop.f32.mrf.mxu0
    %v494 = vadd.f32 %v251, %v493
    %v495 = vpop.f32.mrf.mxu0
    %v496 = vpop.f32.mrf.mxu0
    %497 = vdwg.mxu0
    %v498 = vmax.f32 %v451, 0.0
    %v499 = vmax.f32 %v453, 0.0
    %v500 = vmax.f32 %v492, 0.0
    %v501 = vmax.f32 %v494, 0.0
    %v502 = vpack.c.bf16 %v498, %v498
    %v503 = vpack.c.bf16 %v499, %v499
    %v504 = vpack.c.bf16 %v500, %v500
    %v505 = vpack.c.bf16 %v501, %v501
    %v506 = vld [vmem:[#allocation8] sm:$0xf]
    %v507 = vld [vmem:[#allocation8 + $0x4] sm:$0xf]
    %v508 = vld [vmem:[#allocation8 + $0x8] sm:$0xf]
    %v509 = vld [vmem:[#allocation8 + $0xc] sm:$0xf]
    %v510 = vld [vmem:[#allocation8 + $0x10] sm:$0xf]
    %v511 = vld [vmem:[#allocation8 + $0x14] sm:$0xf]
    %v512 = vld [vmem:[#allocation8 + $0x18] sm:$0xf]
    %v513 = vld [vmem:[#allocation8 + $0x1c] sm:$0xf]
    %v514 = vld [vmem:[#allocation8 + $0x20] sm:$0xf]
    %v515 = vld [vmem:[#allocation8 + $0x24] sm:$0xf]
    %v516 = vld [vmem:[#allocation8 + $0x28] sm:$0xf]
    %v517 = vld [vmem:[#allocation8 + $0x2c] sm:$0xf]
    %v518 = vld [vmem:[#allocation8 + $0x30] sm:$0xf]
    %v519 = vld [vmem:[#allocation8 + $0x34] sm:$0xf]
    %v520 = vld [vmem:[#allocation8 + $0x38] sm:$0xf]
    %v521 = vld [vmem:[#allocation8 + $0x3c] sm:$0xf]
    %v522 = vld [vmem:[#allocation8 + $0x40] sm:$0xf]
    %v523 = vld [vmem:[#allocation8 + $0x44] sm:$0xf]
    %v524 = vld [vmem:[#allocation8 + $0x48] sm:$0xf]
    %v525 = vld [vmem:[#allocation8 + $0x4c] sm:$0xf]
    %v526 = vld [vmem:[#allocation8 + $0x50] sm:$0xf]
    %v527 = vld [vmem:[#allocation8 + $0x54] sm:$0xf]
    %v528 = vld [vmem:[#allocation8 + $0x58] sm:$0xf]
    %v529 = vld [vmem:[#allocation8 + $0x5c] sm:$0xf]
    %v530 = vld [vmem:[#allocation8 + $0x60] sm:$0xf]
    %v531 = vld [vmem:[#allocation8 + $0x64] sm:$0xf]
    %v532 = vld [vmem:[#allocation8 + $0x68] sm:$0xf]
    %v533 = vld [vmem:[#allocation8 + $0x6c] sm:$0xf]
    %v534 = vld [vmem:[#allocation8 + $0x70] sm:$0xf]
    %v535 = vld [vmem:[#allocation8 + $0x74] sm:$0xf]
    %v536 = vld [vmem:[#allocation8 + $0x78] sm:$0xf]
    %v537 = vld [vmem:[#allocation8 + $0x7c] sm:$0xf]
    %v538 = vld [vmem:[#allocation8 + $0x80] sm:$0xf]
    %v539 = vld [vmem:[#allocation8 + $0x84] sm:$0xf]
    %v540 = vld [vmem:[#allocation8 + $0x88] sm:$0xf]
    %v541 = vld [vmem:[#allocation8 + $0x8c] sm:$0xf]
    %v542 = vld [vmem:[#allocation8 + $0x90] sm:$0xf]
    %v543 = vld [vmem:[#allocation8 + $0x94] sm:$0xf]
    %v544 = vld [vmem:[#allocation8 + $0x98] sm:$0xf]
    %v545 = vld [vmem:[#allocation8 + $0x9c] sm:$0xf]
    %v546 = vld [vmem:[#allocation8 + $0xa0] sm:$0xf]
    %v547 = vld [vmem:[#allocation8 + $0xa4] sm:$0xf]
    %v548 = vld [vmem:[#allocation8 + $0xa8] sm:$0xf]
    %v549 = vld [vmem:[#allocation8 + $0xac] sm:$0xf]
    %v550 = vld [vmem:[#allocation8 + $0xb0] sm:$0xf]
    %v551 = vld [vmem:[#allocation8 + $0xb4] sm:$0xf]
    %v552 = vld [vmem:[#allocation8 + $0xb8] sm:$0xf]
    %v553 = vld [vmem:[#allocation8 + $0xbc] sm:$0xf]
    %v554 = vld [vmem:[#allocation8 + $0xc0] sm:$0xf]
    %v555 = vld [vmem:[#allocation8 + $0xc4] sm:$0xf]
    %v556 = vld [vmem:[#allocation8 + $0xc8] sm:$0xf]
    %v557 = vld [vmem:[#allocation8 + $0xcc] sm:$0xf]
    %v558 = vld [vmem:[#allocation8 + $0xd0] sm:$0xf]
    %v559 = vld [vmem:[#allocation8 + $0xd4] sm:$0xf]
    %v560 = vld [vmem:[#allocation8 + $0xd8] sm:$0xf]
    %v561 = vld [vmem:[#allocation8 + $0xdc] sm:$0xf]
    %v562 = vld [vmem:[#allocation8 + $0xe0] sm:$0xf]
    %v563 = vld [vmem:[#allocation8 + $0xe4] sm:$0xf]
    %v564 = vld [vmem:[#allocation8 + $0xe8] sm:$0xf]
    %v565 = vld [vmem:[#allocation8 + $0xec] sm:$0xf]
    %v566 = vld [vmem:[#allocation8 + $0xf0] sm:$0xf]
    %v567 = vld [vmem:[#allocation8 + $0xf4] sm:$0xf]
    %v568 = vld [vmem:[#allocation8 + $0xf8] sm:$0xf]
    %v569 = vld [vmem:[#allocation8 + $0xfc] sm:$0xf]
    %v570 = vld [vmem:[#allocation14 + $0x2] ss:$0 sm:$0xff]
    %v635 = vunpack.c.l.b16 %v506
    %v636 = vunpack.c.l.b16 %v507
    %v637 = vunpack.c.l.b16 %v508
    %v638 = vunpack.c.l.b16 %v509
    %v639 = vunpack.c.l.b16 %v510
    %v640 = vunpack.c.l.b16 %v511
    %v641 = vunpack.c.l.b16 %v512
    %v642 = vunpack.c.l.b16 %v513
    %v643 = vunpack.c.l.b16 %v514
    %v644 = vunpack.c.l.b16 %v515
    %v645 = vunpack.c.l.b16 %v516
    %v646 = vunpack.c.l.b16 %v517
    %v647 = vunpack.c.l.b16 %v518
    %v648 = vunpack.c.l.b16 %v519
    %v649 = vunpack.c.l.b16 %v520
    %v650 = vunpack.c.l.b16 %v521
    %v651 = vunpack.c.l.b16 %v522
    %v652 = vunpack.c.l.b16 %v523
    %v653 = vunpack.c.l.b16 %v524
    %v654 = vunpack.c.l.b16 %v525
    %v655 = vunpack.c.l.b16 %v526
    %v656 = vunpack.c.l.b16 %v527
    %v657 = vunpack.c.l.b16 %v528
    %v658 = vunpack.c.l.b16 %v529
    %v659 = vunpack.c.l.b16 %v530
    %v660 = vunpack.c.l.b16 %v531
    %v661 = vunpack.c.l.b16 %v532
    %v662 = vunpack.c.l.b16 %v533
    %v663 = vunpack.c.l.b16 %v534
    %v664 = vunpack.c.l.b16 %v535
    %v665 = vunpack.c.l.b16 %v536
    %v666 = vunpack.c.l.b16 %v537
    %v667 = vunpack.c.l.b16 %v538
    %v668 = vunpack.c.l.b16 %v539
    %v669 = vunpack.c.l.b16 %v540
    %v670 = vunpack.c.l.b16 %v541
    %v671 = vunpack.c.l.b16 %v542
    %v672 = vunpack.c.l.b16 %v543
    %v673 = vunpack.c.l.b16 %v544
    %v674 = vunpack.c.l.b16 %v545
    %v675 = vunpack.c.l.b16 %v546
    %v676 = vunpack.c.l.b16 %v547
    %v677 = vunpack.c.l.b16 %v548
    %v678 = vunpack.c.l.b16 %v549
    %v679 = vunpack.c.l.b16 %v550
    %v680 = vunpack.c.l.b16 %v551
    %v681 = vunpack.c.l.b16 %v552
    %v682 = vunpack.c.l.b16 %v553
    %v683 = vunpack.c.l.b16 %v554
    %v684 = vunpack.c.l.b16 %v555
    %v685 = vunpack.c.l.b16 %v556
    %v686 = vunpack.c.l.b16 %v557
    %v687 = vunpack.c.l.b16 %v558
    %v688 = vunpack.c.l.b16 %v559
    %v689 = vunpack.c.l.b16 %v560
    %v690 = vunpack.c.l.b16 %v561
    %v691 = vunpack.c.l.b16 %v562
    %v692 = vunpack.c.l.b16 %v563
    %v693 = vunpack.c.l.b16 %v564
    %v694 = vunpack.c.l.b16 %v565
    %v695 = vunpack.c.l.b16 %v566
    %v696 = vunpack.c.l.b16 %v567
    %v697 = vunpack.c.l.b16 %v568
    %v698 = vunpack.c.l.b16 %v569
    %v699 = vpack.c.b16 %v636, %v635
    %v700 = vpack.c.b16 %v638, %v637
    %v701 = vpack.c.b16 %v640, %v639
    %v702 = vpack.c.b16 %v642, %v641
    %v703 = vpack.c.b16 %v644, %v643
    %v704 = vpack.c.b16 %v646, %v645
    %v705 = vpack.c.b16 %v648, %v647
    %v706 = vpack.c.b16 %v650, %v649
    %v707 = vpack.c.b16 %v652, %v651
    %v708 = vpack.c.b16 %v654, %v653
    %v709 = vpack.c.b16 %v656, %v655
    %v710 = vpack.c.b16 %v658, %v657
    %v711 = vpack.c.b16 %v660, %v659
    %v712 = vpack.c.b16 %v662, %v661
    %v713 = vpack.c.b16 %v664, %v663
    %v714 = vpack.c.b16 %v666, %v665
    %v715 = vpack.c.b16 %v668, %v667
    %v716 = vpack.c.b16 %v670, %v669
    %v717 = vpack.c.b16 %v672, %v671
    %v718 = vpack.c.b16 %v674, %v673
    %v719 = vpack.c.b16 %v676, %v675
    %v720 = vpack.c.b16 %v678, %v677
    %v721 = vpack.c.b16 %v680, %v679
    %v722 = vpack.c.b16 %v682, %v681
    %v723 = vpack.c.b16 %v684, %v683
    %v724 = vpack.c.b16 %v686, %v685
    %v725 = vpack.c.b16 %v688, %v687
    %v726 = vpack.c.b16 %v690, %v689
    %v727 = vpack.c.b16 %v692, %v691
    %v728 = vpack.c.b16 %v694, %v693
    %v729 = vpack.c.b16 %v696, %v695
    %v730 = vpack.c.b16 %v698, %v697
    %763 = vmatprep.subr.bf16.mxu0 0
    %764 = vmatpush1.bf16.msra.mxu0 %v706
    %765 = vmatprep.subr.bf16.mxu0 0
    %766 = vmatpush1.bf16.msra.mxu0 %v705
    %767 = vmatprep.subr.bf16.mxu0 0
    %768 = vmatpush1.bf16.msra.mxu0 %v704
    %769 = vmatprep.subr.bf16.mxu0 0
    %770 = vmatpush1.bf16.msra.mxu0 %v703
    %771 = vmatprep.subr.bf16.mxu0 0
    %772 = vmatpush1.bf16.msra.mxu0 %v702
    %773 = vmatprep.subr.bf16.mxu0 0
    %774 = vmatpush1.bf16.msra.mxu0 %v701
    %775 = vmatprep.subr.bf16.mxu0 0
    %776 = vmatpush1.bf16.msra.mxu0 %v700
    %777 = vmatprep.subr.bf16.mxu0 0
    %778 = vmatpush1.bf16.msra.mxu0 %v699
    %779 = vmatprep.subr.bf16.mxu0 0
    %780 = vmatpush2.bf16.msra.mxu0 %v714
    %781 = vmatprep.subr.bf16.mxu0 0
    %782 = vmatpush2.bf16.msra.mxu0 %v713
    %783 = vmatprep.subr.bf16.mxu0 0
    %784 = vmatpush2.bf16.msra.mxu0 %v712
    %785 = vmatprep.subr.bf16.mxu0 0
    %786 = vmatpush2.bf16.msra.mxu0 %v711
    %787 = vmatprep.subr.bf16.mxu0 0
    %788 = vmatpush2.bf16.msra.mxu0 %v710
    %789 = vmatprep.subr.bf16.mxu0 0
    %790 = vmatpush2.bf16.msra.mxu0 %v709
    %791 = vmatprep.subr.bf16.mxu0 0
    %792 = vmatpush2.bf16.msra.mxu0 %v708
    %793 = vmatprep.subr.bf16.mxu0 0
    %794 = vmatpush2.bf16.msra.mxu0 %v707
    %795 = vmatprep.mubr.bf16.mxu0 %v503
    %796 = vmatmul.mubr.bf16.gmra.mxu0 %v502
    %v797 = vpop.f32.mrf.mxu0
    %v798 = vadd.f32 %v570, %v797
    %v799 = vpop.f32.mrf.mxu0
    %v800 = vpop.f32.mrf.mxu0
    %v801 = vpop.f32.mrf.mxu0
    %802 = vdwg.mxu0
    %803 = vmatprep.subr.bf16.mxu0 0
    %804 = vmatpush1.bf16.msra.mxu0 %v722
    %805 = vmatprep.subr.bf16.mxu0 0
    %806 = vmatpush1.bf16.msra.mxu0 %v721
    %807 = vmatprep.subr.bf16.mxu0 0
    %808 = vmatpush1.bf16.msra.mxu0 %v720
    %809 = vmatprep.subr.bf16.mxu0 0
    %810 = vmatpush1.bf16.msra.mxu0 %v719
    %811 = vmatprep.subr.bf16.mxu0 0
    %812 = vmatpush1.bf16.msra.mxu0 %v718
    %813 = vmatprep.subr.bf16.mxu0 0
    %814 = vmatpush1.bf16.msra.mxu0 %v717
    %815 = vmatprep.subr.bf16.mxu0 0
    %816 = vmatpush1.bf16.msra.mxu0 %v716
    %817 = vmatprep.subr.bf16.mxu0 0
    %818 = vmatpush1.bf16.msra.mxu0 %v715
    %819 = vmatprep.subr.bf16.mxu0 0
    %820 = vmatpush2.bf16.msra.mxu0 %v730
    %821 = vmatprep.subr.bf16.mxu0 0
    %822 = vmatpush2.bf16.msra.mxu0 %v729
    %823 = vmatprep.subr.bf16.mxu0 0
    %824 = vmatpush2.bf16.msra.mxu0 %v728
    %825 = vmatprep.subr.bf16.mxu0 0
    %826 = vmatpush2.bf16.msra.mxu0 %v727
    %827 = vmatprep.subr.bf16.mxu0 0
    %828 = vmatpush2.bf16.msra.mxu0 %v726
    %829 = vmatprep.subr.bf16.mxu0 0
    %830 = vmatpush2.bf16.msra.mxu0 %v725
    %831 = vmatprep.subr.bf16.mxu0 0
    %832 = vmatpush2.bf16.msra.mxu0 %v724
    %833 = vmatprep.subr.bf16.mxu0 0
    %834 = vmatpush2.bf16.msra.mxu0 %v723
    %835 = vmatprep.mubr.bf16.mxu0 %v505
    %836 = vmatmul.mubr.bf16.gmra.mxu0 %v504
    %v837 = vpop.f32.mrf.mxu0
    %v838 = vadd.f32 %v798, %v837
    %v839 = vpop.f32.mrf.mxu0
    %v840 = vpop.f32.mrf.mxu0
    %v841 = vpop.f32.mrf.mxu0
    %842 = vdwg.mxu0
    %v843 = vmax.f32 %v838, 0.0
    %v844 = vpack.c.bf16 %v843, %v843
    %v845 = vld [vmem:[#allocation10] sm:$0xf]
    %v846 = vld [vmem:[#allocation10 + $0x4] sm:$0xf]
    %v847 = vld [vmem:[#allocation10 + $0x8] sm:$0xf]
    %v848 = vld [vmem:[#allocation10 + $0xc] sm:$0xf]
    %v849 = vld [vmem:[#allocation10 + $0x10] sm:$0xf]
    %v850 = vld [vmem:[#allocation10 + $0x14] sm:$0xf]
    %v851 = vld [vmem:[#allocation10 + $0x18] sm:$0xf]
    %v852 = vld [vmem:[#allocation10 + $0x1c] sm:$0xf]
    %v853 = vld [vmem:[#allocation10 + $0x20] sm:$0xf]
    %v854 = vld [vmem:[#allocation10 + $0x24] sm:$0xf]
    %v855 = vld [vmem:[#allocation10 + $0x28] sm:$0xf]
    %v856 = vld [vmem:[#allocation10 + $0x2c] sm:$0xf]
    %v857 = vld [vmem:[#allocation10 + $0x30] sm:$0xf]
    %v858 = vld [vmem:[#allocation10 + $0x34] sm:$0xf]
    %v859 = vld [vmem:[#allocation10 + $0x38] sm:$0xf]
    %v860 = vld [vmem:[#allocation10 + $0x3c] sm:$0xf]
    %v861 = vld [vmem:[#allocation14 + $0x3] ss:$0 sm:$0xff]
    %v878 = vunpack.c.l.b16 %v845
    %v879 = vunpack.c.l.b16 %v846
    %v880 = vunpack.c.l.b16 %v847
    %v881 = vunpack.c.l.b16 %v848
    %v882 = vunpack.c.l.b16 %v849
    %v883 = vunpack.c.l.b16 %v850
    %v884 = vunpack.c.l.b16 %v851
    %v885 = vunpack.c.l.b16 %v852
    %v886 = vunpack.c.l.b16 %v853
    %v887 = vunpack.c.l.b16 %v854
    %v888 = vunpack.c.l.b16 %v855
    %v889 = vunpack.c.l.b16 %v856
    %v890 = vunpack.c.l.b16 %v857
    %v891 = vunpack.c.l.b16 %v858
    %v892 = vunpack.c.l.b16 %v859
    %v893 = vunpack.c.l.b16 %v860
    %v894 = vpack.c.b16 %v879, %v878
    %v895 = vpack.c.b16 %v881, %v880
    %v896 = vpack.c.b16 %v883, %v882
    %v897 = vpack.c.b16 %v885, %v884
    %v898 = vpack.c.b16 %v887, %v886
    %v899 = vpack.c.b16 %v889, %v888
    %v900 = vpack.c.b16 %v891, %v890
    %v901 = vpack.c.b16 %v893, %v892
    %910 = vmatprep.subr.bf16.mxu0 0
    %911 = vmatpush1.bf16.msra.mxu0 %v901
    %912 = vmatprep.subr.bf16.mxu0 0
    %913 = vmatpush1.bf16.msra.mxu0 %v900
    %914 = vmatprep.subr.bf16.mxu0 0
    %915 = vmatpush1.bf16.msra.mxu0 %v899
    %916 = vmatprep.subr.bf16.mxu0 0
    %917 = vmatpush1.bf16.msra.mxu0 %v898
    %918 = vmatprep.subr.bf16.mxu0 0
    %919 = vmatpush1.bf16.msra.mxu0 %v897
    %920 = vmatprep.subr.bf16.mxu0 0
    %921 = vmatpush1.bf16.msra.mxu0 %v896
    %922 = vmatprep.subr.bf16.mxu0 0
    %923 = vmatpush1.bf16.msra.mxu0 %v895
    %924 = vmatprep.subr.bf16.mxu0 0
    %925 = vmatpush1.bf16.msra.mxu0 %v894
    %926 = vmatprep.subr.bf16.mxu0 0
    %927 = vmatpush2.bf16.msra.mxu0 0
    %928 = vmatprep.subr.bf16.mxu0 0
    %929 = vmatpush2.bf16.msra.mxu0 0
    %930 = vmatprep.subr.bf16.mxu0 0
    %931 = vmatpush2.bf16.msra.mxu0 0
    %932 = vmatprep.subr.bf16.mxu0 0
    %933 = vmatpush2.bf16.msra.mxu0 0
    %934 = vmatprep.subr.bf16.mxu0 0
    %935 = vmatpush2.bf16.msra.mxu0 0
    %936 = vmatprep.subr.bf16.mxu0 0
    %937 = vmatpush2.bf16.msra.mxu0 0
    %938 = vmatprep.subr.bf16.mxu0 0
    %939 = vmatpush2.bf16.msra.mxu0 0
    %940 = vmatprep.subr.bf16.mxu0 0
    %941 = vmatpush2.bf16.msra.mxu0 0
    %942 = vmatprep.mubr.bf16.mxu0 0
    %943 = vmatmul.mubr.bf16.gmra.mxu0 %v844
    %v944 = vpop.f32.mrf.mxu0
    %v945 = vadd.f32 %v861, %v944
    %v946 = vpop.f32.mrf.mxu0
    %v947 = vpop.f32.mrf.mxu0
    %v948 = vpop.f32.mrf.mxu0
    %949 = vdwg.mxu0
    %v950 = vmax.f32 %v945, 0.0
    %v951 = vpack.c.bf16 %v950, %v950
    %v952 = vld [vmem:[#allocation11] sm:$0xf]
    %v953 = vld [vmem:[#allocation11 + $0x4] sm:$0xf]
    %v954 = vld [vmem:[#allocation11 + $0x8] sm:$0xf]
    %v955 = vld [vmem:[#allocation11 + $0xc] sm:$0xf]
    %v956 = vld [vmem:[#allocation11 + $0x10] sm:$0xf]
    %v957 = vld [vmem:[#allocation11 + $0x14] sm:$0xf]
    %v958 = vld [vmem:[#allocation11 + $0x18] sm:$0xf]
    %v959 = vld [vmem:[#allocation11 + $0x1c] sm:$0xf]
    %v960 = vld [vmem:[#allocation11 + $0x20] sm:$0xf]
    %v961 = vld [vmem:[#allocation11 + $0x24] sm:$0xf]
    %v962 = vld [vmem:[#allocation11 + $0x28] sm:$0xf]
    %v963 = vld [vmem:[#allocation11 + $0x2c] sm:$0xf]
    %v964 = vld [vmem:[#allocation11 + $0x30] sm:$0xf]
    %v965 = vld [vmem:[#allocation11 + $0x34] sm:$0xf]
    %v966 = vld [vmem:[#allocation11 + $0x38] sm:$0xf]
    %v967 = vld [vmem:[#allocation11 + $0x3c] sm:$0xf]
    %v968 = vld [vmem:[#allocation14 + $0x4] ss:$0 sm:$0xff]
    %v985 = vunpack.c.l.b16 %v952
    %v986 = vunpack.c.l.b16 %v953
    %v987 = vunpack.c.l.b16 %v954
    %v988 = vunpack.c.l.b16 %v955
    %v989 = vunpack.c.l.b16 %v956
    %v990 = vunpack.c.l.b16 %v957
    %v991 = vunpack.c.l.b16 %v958
    %v992 = vunpack.c.l.b16 %v959
    %v993 = vunpack.c.l.b16 %v960
    %v994 = vunpack.c.l.b16 %v961
    %v995 = vunpack.c.l.b16 %v962
    %v996 = vunpack.c.l.b16 %v963
    %v997 = vunpack.c.l.b16 %v964
    %v998 = vunpack.c.l.b16 %v965
    %v999 = vunpack.c.l.b16 %v966
    %v1000 = vunpack.c.l.b16 %v967
    %v1001 = vpack.c.b16 %v986, %v985
    %v1002 = vpack.c.b16 %v988, %v987
    %v1003 = vpack.c.b16 %v990, %v989
    %v1004 = vpack.c.b16 %v992, %v991
    %v1005 = vpack.c.b16 %v994, %v993
    %v1006 = vpack.c.b16 %v996, %v995
    %v1007 = vpack.c.b16 %v998, %v997
    %v1008 = vpack.c.b16 %v1000, %v999
    %1017 = vmatprep.subr.bf16.mxu0 0
    %1018 = vmatpush1.bf16.msra.mxu0 %v1008
    %1019 = vmatprep.subr.bf16.mxu0 0
    %1020 = vmatpush1.bf16.msra.mxu0 %v1007
    %1021 = vmatprep.subr.bf16.mxu0 0
    %1022 = vmatpush1.bf16.msra.mxu0 %v1006
    %1023 = vmatprep.subr.bf16.mxu0 0
    %1024 = vmatpush1.bf16.msra.mxu0 %v1005
    %1025 = vmatprep.subr.bf16.mxu0 0
    %1026 = vmatpush1.bf16.msra.mxu0 %v1004
    %1027 = vmatprep.subr.bf16.mxu0 0
    %1028 = vmatpush1.bf16.msra.mxu0 %v1003
    %1029 = vmatprep.subr.bf16.mxu0 0
    %1030 = vmatpush1.bf16.msra.mxu0 %v1002
    %1031 = vmatprep.subr.bf16.mxu0 0
    %1032 = vmatpush1.bf16.msra.mxu0 %v1001
    %1033 = vmatprep.subr.bf16.mxu0 0
    %1034 = vmatpush2.bf16.msra.mxu0 0
    %1035 = vmatprep.subr.bf16.mxu0 0
    %1036 = vmatpush2.bf16.msra.mxu0 0
    %1037 = vmatprep.subr.bf16.mxu0 0
    %1038 = vmatpush2.bf16.msra.mxu0 0
    %1039 = vmatprep.subr.bf16.mxu0 0
    %1040 = vmatpush2.bf16.msra.mxu0 0
    %1041 = vmatprep.subr.bf16.mxu0 0
    %1042 = vmatpush2.bf16.msra.mxu0 0
    %1043 = vmatprep.subr.bf16.mxu0 0
    %1044 = vmatpush2.bf16.msra.mxu0 0
    %1045 = vmatprep.subr.bf16.mxu0 0
    %1046 = vmatpush2.bf16.msra.mxu0 0
    %1047 = vmatprep.subr.bf16.mxu0 0
    %1048 = vmatpush2.bf16.msra.mxu0 0
    %1049 = vmatprep.mubr.bf16.mxu0 0
    %1050 = vmatmul.mubr.bf16.gmra.mxu0 %v951
    %v1051 = vpop.f32.mrf.mxu0
    %v1052 = vadd.f32 %v968, %v1051
    %v1053 = vpop.f32.mrf.mxu0
    %v1054 = vpop.f32.mrf.mxu0
    %v1055 = vpop.f32.mrf.mxu0
    %1056 = vdwg.mxu0
    %v1057 = vmax.f32 %v1052, 0.0
    %v1058 = vpack.c.bf16 %v1057, %v1057
    %v1059 = vld [vmem:[#allocation13] sm:$0xf]
    %v1060 = vld [vmem:[#allocation13 + $0x4] sm:$0xf]
    %v1061 = vld [vmem:[#allocation13 + $0x8] sm:$0xf]
    %v1062 = vld [vmem:[#allocation13 + $0xc] sm:$0xf]
    %v1063 = vld [vmem:[#allocation13 + $0x10] sm:$0xf]
    %v1064 = vld [vmem:[#allocation13 + $0x14] sm:$0xf]
    %v1065 = vld [vmem:[#allocation13 + $0x18] sm:$0xf]
    %v1066 = vld [vmem:[#allocation13 + $0x1c] sm:$0xf]
    %v1067 = vld [vmem:[#allocation13 + $0x20] sm:$0xf]
    %v1068 = vld [vmem:[#allocation13 + $0x24] sm:$0xf]
    %v1069 = vld [vmem:[#allocation13 + $0x28] sm:$0xf]
    %v1070 = vld [vmem:[#allocation13 + $0x2c] sm:$0xf]
    %v1071 = vld [vmem:[#allocation13 + $0x30] sm:$0xf]
    %v1072 = vld [vmem:[#allocation13 + $0x34] sm:$0xf]
    %v1073 = vld [vmem:[#allocation13 + $0x38] sm:$0xf]
    %v1074 = vld [vmem:[#allocation13 + $0x3c] sm:$0xf]
    %v1075 = vld [vmem:[#allocation14 + $0x5] ss:$0 sm:$0xff]
    %v1092 = vunpack.c.l.b16 %v1059
    %v1093 = vunpack.c.l.b16 %v1060
    %v1094 = vunpack.c.l.b16 %v1061
    %v1095 = vunpack.c.l.b16 %v1062
    %v1096 = vunpack.c.l.b16 %v1063
    %v1097 = vunpack.c.l.b16 %v1064
    %v1098 = vunpack.c.l.b16 %v1065
    %v1099 = vunpack.c.l.b16 %v1066
    %v1100 = vunpack.c.l.b16 %v1067
    %v1101 = vunpack.c.l.b16 %v1068
    %v1102 = vunpack.c.l.b16 %v1069
    %v1103 = vunpack.c.l.b16 %v1070
    %v1104 = vunpack.c.l.b16 %v1071
    %v1105 = vunpack.c.l.b16 %v1072
    %v1106 = vunpack.c.l.b16 %v1073
    %v1107 = vunpack.c.l.b16 %v1074
    %v1108 = vpack.c.b16 %v1093, %v1092
    %v1109 = vpack.c.b16 %v1095, %v1094
    %v1110 = vpack.c.b16 %v1097, %v1096
    %v1111 = vpack.c.b16 %v1099, %v1098
    %v1112 = vpack.c.b16 %v1101, %v1100
    %v1113 = vpack.c.b16 %v1103, %v1102
    %v1114 = vpack.c.b16 %v1105, %v1104
    %v1115 = vpack.c.b16 %v1107, %v1106
    %1124 = vmatprep.subr.bf16.mxu0 0
    %1125 = vmatpush1.bf16.msra.mxu0 %v1115
    %1126 = vmatprep.subr.bf16.mxu0 0
    %1127 = vmatpush1.bf16.msra.mxu0 %v1114
    %1128 = vmatprep.subr.bf16.mxu0 0
    %1129 = vmatpush1.bf16.msra.mxu0 %v1113
    %1130 = vmatprep.subr.bf16.mxu0 0
    %1131 = vmatpush1.bf16.msra.mxu0 %v1112
    %1132 = vmatprep.subr.bf16.mxu0 0
    %1133 = vmatpush1.bf16.msra.mxu0 %v1111
    %1134 = vmatprep.subr.bf16.mxu0 0
    %1135 = vmatpush1.bf16.msra.mxu0 %v1110
    %1136 = vmatprep.subr.bf16.mxu0 0
    %1137 = vmatpush1.bf16.msra.mxu0 %v1109
    %1138 = vmatprep.subr.bf16.mxu0 0
    %1139 = vmatpush1.bf16.msra.mxu0 %v1108
    %1140 = vmatprep.subr.bf16.mxu0 0
    %1141 = vmatpush2.bf16.msra.mxu0 0
    %1142 = vmatprep.subr.bf16.mxu0 0
    %1143 = vmatpush2.bf16.msra.mxu0 0
    %1144 = vmatprep.subr.bf16.mxu0 0
    %1145 = vmatpush2.bf16.msra.mxu0 0
    %1146 = vmatprep.subr.bf16.mxu0 0
    %1147 = vmatpush2.bf16.msra.mxu0 0
    %1148 = vmatprep.subr.bf16.mxu0 0
    %1149 = vmatpush2.bf16.msra.mxu0 0
    %1150 = vmatprep.subr.bf16.mxu0 0
    %1151 = vmatpush2.bf16.msra.mxu0 0
    %1152 = vmatprep.subr.bf16.mxu0 0
    %1153 = vmatpush2.bf16.msra.mxu0 0
    %1154 = vmatprep.subr.bf16.mxu0 0
    %1155 = vmatpush2.bf16.msra.mxu0 0
    %1156 = vmatprep.mubr.bf16.mxu0 0
    %1157 = vmatmul.mubr.bf16.gmra.mxu0 %v1058
    %v1158 = vpop.f32.mrf.mxu0
    %v1159 = vadd.f32 %v1075, %v1158
    %v1160 = vpop.f32.mrf.mxu0
    %v1161 = vpop.f32.mrf.mxu0
    %v1162 = vpop.f32.mrf.mxu0
    %1163 = vdwg.mxu0
    %1164 = vst [vmem:[#allocation16] sm:$0xff] %v1159
    // Predicated region
    $region66: #{tpu_custom_call.1} parent=1 // pred_check
      _
    $region67: #{tpu_custom_call.1} parent=1 // pred_check_branch
      %1166 = sbr.rel (0) target = $region69
    $region68: #{tpu_custom_call.1} parent=1 // pred_region
      %s1168 = ssub.s32 128, 128
      %1169 = vsyncadd [#allocation4], %s1168
      %s1171 = sshll.u32 [#allocation16], 4
      %s1172 = int_to_ptr.vmem [resolvable:$true] %s1171
      %1174 = dma.vmem_to_hbm [thread:$0]  %s1172, 128, %s8, [#allocation4]
    $region69: #{tpu_custom_call.1} parent=1 // pred_fallthru
      _
    // Predicated region
    $region70: #{tpu_custom_call.1} parent=1 // pred_check
      _
    $region71: #{tpu_custom_call.1} parent=1 // pred_check_branch
      %1176 = sbr.rel (0) target = $region73
    $region72: #{tpu_custom_call.1} parent=1 // pred_region
      %1177 = dma.done [#allocation4], 128
    $region73: #{tpu_custom_call.1} parent=1 // pred_fallthru
      _
    %1178 = vsyncpa [#allocation3], 1
    %1179 = vsyncpa [#allocation6], 1
    %1180 = vsyncpa [#allocation9], 1
    %1181 = vsyncpa [#allocation12], 1
    %1182 = vsyncpa [#allocation15], 1
    %1183 = vsyncpa [#allocation4], 1

</llo_original>
